<compile_context>
chip_gen: v7x
topology: tpu7x:2x2x1
jax: 0.10.0
libtpu: 0.0.40
codegen_flags: <defaults>
</compile_context>

<pallas_src>
import functools
import math

import jax
import jax.numpy as jnp
import numpy as np
from jax.experimental import pallas as pl
from jax.experimental.pallas import tpu as pltpu


def _gqa_kernel(x_ref, wqkv_ref, wo_ref, cos_ref, sin_ref, o_ref, *,
                head_dim, num_query_heads, num_kv_heads):
    seq = x_ref.shape[0]
    half = head_dim // 2
    group = num_query_heads // num_kv_heads
    q_cols = num_query_heads * head_dim
    kv_cols = num_kv_heads * head_dim

    x = x_ref[...]                                        # [S, E] native dtype

    # ---- fused Q/K/V projection: one lane-dense MXU matmul.
    qkv = jnp.dot(x, wqkv_ref[...], preferred_element_type=jnp.float32)
    q = qkv[:, :q_cols]                                   # [S, Hq*D]
    k = qkv[:, q_cols:q_cols + kv_cols]                   # [S, Hkv*D]
    v = qkv[:, q_cols + kv_cols:]                         # [S, Hkv*D]

    cos = cos_ref[...].astype(jnp.float32)                # [S, D/2]
    sin = sin_ref[...].astype(jnp.float32)                # [S, D/2]

    def rope(t):                                          # t: [S, D] float32
        t1 = t[:, :half]
        t2 = t[:, half:]
        return jnp.concatenate([t1 * cos - t2 * sin,
                                t1 * sin + t2 * cos], axis=-1)

    # ---- additive causal mask (single invocation, so built exactly once).
    row = jax.lax.broadcasted_iota(jnp.int32, (seq, seq), 0)
    col = jax.lax.broadcasted_iota(jnp.int32, (seq, seq), 1)
    mask = jnp.where(col <= row, 0.0, -jnp.inf).astype(jnp.float32)

    scale = 1.0 / math.sqrt(head_dim)

    # ---- attention: K-RoPE / V slice once per KV head, reused by its q group.
    ctx_parts = []
    for kv_h in range(num_kv_heads):
        k_h = rope(k[:, kv_h * head_dim:(kv_h + 1) * head_dim])      # [S, D]
        v_h = v[:, kv_h * head_dim:(kv_h + 1) * head_dim]            # [S, D]
        for g in range(group):
            h = kv_h * group + g
            q_h = rope(q[:, h * head_dim:(h + 1) * head_dim])        # [S, D]
            s = jnp.dot(q_h, k_h.T, preferred_element_type=jnp.float32)
            s = s * scale + mask
            m = jnp.max(s, axis=-1, keepdims=True)                   # f32 softmax
            p = jnp.exp(s - m)
            denom = jnp.sum(p, axis=-1, keepdims=True)
            probs = p * pl.reciprocal(denom, approx=True)            # EUP slot
            ctx_parts.append(jnp.dot(probs, v_h,
                                     preferred_element_type=jnp.float32))

    # ---- single lane-dense output projection [S, Hq*D] @ [Hq*D, E].
    ctx = jnp.concatenate(ctx_parts, axis=-1)                        # [S, Hq*D]
    out = jnp.dot(ctx, wo_ref[...], preferred_element_type=jnp.float32)
    o_ref[...] = out.astype(o_ref.dtype)


def rotary_tables(max_seq_len, head_dim):
    """Half-width cos/sin tables; the module's full table is [theta, theta]."""
    inv_freq = 1.0 / (10000.0 ** (jnp.arange(0, head_dim, 2, dtype=jnp.float32)
                                  / head_dim))
    pos = jnp.arange(max_seq_len, dtype=jnp.float32)
    theta = pos[:, None] * inv_freq[None, :]               # [S_max, D/2]
    return jnp.cos(theta), jnp.sin(theta)


def gqa_forward(x, wq, wk, wv, wo, cos_half, sin_half, *,
                num_query_heads, num_kv_heads, head_dim):
    seq_len, emb = x.shape

    # Head-major flattening: columns [h*D:(h+1)*D] belong to head h.
    wq_flat = jnp.transpose(wq, (1, 0, 2)).reshape(emb, num_query_heads * head_dim)
    wk_flat = jnp.transpose(wk, (1, 0, 2)).reshape(emb, num_kv_heads * head_dim)
    wv_flat = jnp.transpose(wv, (1, 0, 2)).reshape(emb, num_kv_heads * head_dim)
    wqkv = jnp.concatenate([wq_flat, wk_flat, wv_flat], axis=1)
    wo_flat = wo.reshape(num_query_heads * head_dim, emb)

    kernel = functools.partial(_gqa_kernel, head_dim=head_dim,
                               num_query_heads=num_query_heads,
                               num_kv_heads=num_kv_heads)

    vmem = lambda: pl.BlockSpec(memory_space=pltpu.MemorySpace.VMEM)
    return pl.pallas_call(
        kernel,
        out_shape=jax.ShapeDtypeStruct((seq_len, emb), x.dtype),
        in_specs=[vmem() for _ in range(5)],
        out_specs=vmem(),
    )(x, wqkv, wo_flat, cos_half, sin_half)


def gqa_reference(x, wq, wk, wv, wo, cos_half, sin_half, *, num_query_heads,
                  num_kv_heads, head_dim):
    """Pure-JAX reference mirroring the PyTorch forward."""
    seq_len = x.shape[0]
    group = num_query_heads // num_kv_heads
    half = head_dim // 2
    c = cos_half[:seq_len][:, None, :]                    # [S, 1, D/2]
    s = sin_half[:seq_len][:, None, :]

    def rope(t):                                          # t: [S, H, D]
        t1, t2 = t[..., :half], t[..., half:]
        return jnp.concatenate([t1 * c - t2 * s, t1 * s + t2 * c], axis=-1)

    q = jnp.einsum('se,hed->shd', x, wq)                  # [S, Hq, D]
    k = jnp.einsum('se,hed->shd', x, wk)                  # [S, Hkv, D]
    v = jnp.einsum('se,hed->shd', x, wv)
    q, k = rope(q), rope(k)
    k = jnp.repeat(k, group, axis=1)                      # repeat_interleave
    v = jnp.repeat(v, group, axis=1)

    q = q.transpose(1, 0, 2)                              # [Hq, S, D]
    k = k.transpose(1, 0, 2)
    v = v.transpose(1, 0, 2)
    scores = jnp.einsum('hqd,hkd->hqk', q, k) / math.sqrt(head_dim)
    mask = jnp.tril(jnp.ones((seq_len, seq_len)))[None]
    scores = jnp.where(mask == 0, -jnp.inf, scores)
    probs = jax.nn.softmax(scores, axis=-1)
    ctx = jnp.einsum('hqk,hkd->hqd', probs, v)            # [Hq, S, D]
    return jnp.einsum('hsd,hde->se', ctx, wo)             # [S, E]


if __name__ == "__main__":
    # Module hyperparameters (embedding_dim == num_query_heads * head_dim).
    num_query_heads = 4
    num_kv_heads = 2
    head_dim = 8
    embedding_dim = num_query_heads * head_dim            # 32
    max_seq_len = 16
    seq_len = 8

    key = jax.random.PRNGKey(0)
    kx, kq, kk, kv, ko = jax.random.split(key, 5)

    x = jax.random.normal(kx, (seq_len, embedding_dim), dtype=jnp.float32)
    scale = 1.0 / math.sqrt(embedding_dim)
    wq = jax.random.normal(kq, (num_query_heads, embedding_dim, head_dim),
                           dtype=jnp.float32) * scale
    wk = jax.random.normal(kk, (num_kv_heads, embedding_dim, head_dim),
                           dtype=jnp.float32) * scale
    wv = jax.random.normal(kv, (num_kv_heads, embedding_dim, head_dim),
                           dtype=jnp.float32) * scale
    wo = jax.random.normal(ko, (num_query_heads, head_dim, embedding_dim),
                           dtype=jnp.float32) * scale

    cos_full, sin_full = rotary_tables(max_seq_len, head_dim)
    position_ids = jnp.arange(seq_len)
    cos = cos_full[position_ids]                          # [S, D/2]
    sin = sin_full[position_ids]

    out = gqa_forward(x, wq, wk, wv, wo, cos, sin,
                      num_query_heads=num_query_heads,
                      num_kv_heads=num_kv_heads,
                      head_dim=head_dim)
    out = jax.block_until_ready(out)

    ref = gqa_reference(x, wq, wk, wv, wo, cos, sin,
                        num_query_heads=num_query_heads,
                        num_kv_heads=num_kv_heads,
                        head_dim=head_dim)
    # Tolerance covers the EUP approximate reciprocal used in the softmax
    # normalization; everything else is exact f32 math.
    np.testing.assert_allclose(np.asarray(out), np.asarray(ref),
                               rtol=5e-3, atol=5e-3)
    print("KERNEL_OK")
</pallas_src>

<mosaic_0001>
module attributes {stable_mosaic.version = 11 : i64} {
  func.func @_gqa_kernel(%arg0: memref<8x32xf32, #tpu.memory_space<vmem>>, %arg1: memref<32x64xf32, #tpu.memory_space<vmem>>, %arg2: memref<32x32xf32, #tpu.memory_space<vmem>>, %arg3: memref<8x4xf32, #tpu.memory_space<vmem>>, %arg4: memref<8x4xf32, #tpu.memory_space<vmem>>, %arg5: memref<8x32xf32, #tpu.memory_space<vmem>>) attributes {dimension_semantics = [], scalar_prefetch = 0 : i64, scratch_operands = 0 : i64, tpu.core_type = #tpu.core_type<tc>} {
    %c0 = arith.constant 0 : index
    %c0_0 = arith.constant 0 : index
    %0 = vector.load %arg0[%c0, %c0_0] : memref<8x32xf32, #tpu.memory_space<vmem>>, vector<8x32xf32>
    %c0_1 = arith.constant 0 : index
    %c0_2 = arith.constant 0 : index
    %1 = vector.load %arg1[%c0_1, %c0_2] : memref<32x64xf32, #tpu.memory_space<vmem>>, vector<32x64xf32>
    %cst = arith.constant dense<0.000000e+00> : vector<8x64xf32>
    %2 = tpu.matmul %0, %1, %cst {dimension_numbers = #tpu.dot_dimension_numbers<[1], [0], [0], [1], [0, 0, 1, 1], [], []>} : vector<8x32xf32>, vector<32x64xf32>, vector<8x64xf32> -> vector<8x64xf32>
    %3 = vector.extract_strided_slice %2 {offsets = [0, 0], sizes = [8, 32], strides = [1, 1]} : vector<8x64xf32> to vector<8x32xf32>
    %4 = vector.extract_strided_slice %2 {offsets = [0, 32], sizes = [8, 16], strides = [1, 1]} : vector<8x64xf32> to vector<8x16xf32>
    %5 = vector.extract_strided_slice %2 {offsets = [0, 48], sizes = [8, 16], strides = [1, 1]} : vector<8x64xf32> to vector<8x16xf32>
    %c0_3 = arith.constant 0 : index
    %c0_4 = arith.constant 0 : index
    %6 = vector.load %arg3[%c0_3, %c0_4] : memref<8x4xf32, #tpu.memory_space<vmem>>, vector<8x4xf32>
    %c0_5 = arith.constant 0 : index
    %c0_6 = arith.constant 0 : index
    %7 = vector.load %arg4[%c0_5, %c0_6] : memref<8x4xf32, #tpu.memory_space<vmem>>, vector<8x4xf32>
    %8 = tpu.iota {dimensions = array<i32: 0>} : vector<8x8xi32>
    %9 = tpu.iota {dimensions = array<i32: 1>} : vector<8x8xi32>
    %10 = arith.cmpi sle, %9, %8 : vector<8x8xi32>
    %cst_7 = arith.constant 0.000000e+00 : f32
    %cst_8 = arith.constant 0xFF800000 : f32
    %11 = vector.broadcast %cst_7 : f32 to vector<8x8xf32>
    %12 = vector.broadcast %cst_8 : f32 to vector<8x8xf32>
    %13 = arith.select %10, %11, %12 : vector<8x8xi1>, vector<8x8xf32>
    %14 = vector.extract_strided_slice %4 {offsets = [0, 0], sizes = [8, 8], strides = [1, 1]} : vector<8x16xf32> to vector<8x8xf32>
    %15 = vector.extract_strided_slice %14 {offsets = [0, 0], sizes = [8, 4], strides = [1, 1]} : vector<8x8xf32> to vector<8x4xf32>
    %16 = vector.extract_strided_slice %14 {offsets = [0, 4], sizes = [8, 4], strides = [1, 1]} : vector<8x8xf32> to vector<8x4xf32>
    %17 = arith.mulf %15, %6 : vector<8x4xf32>
    %18 = arith.mulf %16, %7 : vector<8x4xf32>
    %19 = arith.subf %17, %18 : vector<8x4xf32>
    %20 = arith.mulf %15, %7 : vector<8x4xf32>
    %21 = arith.mulf %16, %6 : vector<8x4xf32>
    %22 = arith.addf %20, %21 : vector<8x4xf32>
    %23 = tpu.concatenate %19, %22 in 1 : vector<8x4xf32>, vector<8x4xf32> -> vector<8x8xf32>
    %24 = vector.extract_strided_slice %5 {offsets = [0, 0], sizes = [8, 8], strides = [1, 1]} : vector<8x16xf32> to vector<8x8xf32>
    %25 = vector.extract_strided_slice %3 {offsets = [0, 0], sizes = [8, 8], strides = [1, 1]} : vector<8x32xf32> to vector<8x8xf32>
    %26 = vector.extract_strided_slice %25 {offsets = [0, 0], sizes = [8, 4], strides = [1, 1]} : vector<8x8xf32> to vector<8x4xf32>
    %27 = vector.extract_strided_slice %25 {offsets = [0, 4], sizes = [8, 4], strides = [1, 1]} : vector<8x8xf32> to vector<8x4xf32>
    %28 = arith.mulf %26, %6 : vector<8x4xf32>
    %29 = arith.mulf %27, %7 : vector<8x4xf32>
    %30 = arith.subf %28, %29 : vector<8x4xf32>
    %31 = arith.mulf %26, %7 : vector<8x4xf32>
    %32 = arith.mulf %27, %6 : vector<8x4xf32>
    %33 = arith.addf %31, %32 : vector<8x4xf32>
    %34 = tpu.concatenate %30, %33 in 1 : vector<8x4xf32>, vector<8x4xf32> -> vector<8x8xf32>
    %35 = tpu.transpose %23, [1, 0] : vector<8x8xf32> -> vector<8x8xf32>
    %cst_9 = arith.constant dense<0.000000e+00> : vector<8x8xf32>
    %36 = tpu.matmul %34, %35, %cst_9 {dimension_numbers = #tpu.dot_dimension_numbers<[1], [0], [0], [1], [0, 0, 1, 1], [], []>} : vector<8x8xf32>, vector<8x8xf32>, vector<8x8xf32> -> vector<8x8xf32>
    %cst_10 = arith.constant 0.353553385 : f32
    %37 = vector.broadcast %cst_10 : f32 to vector<8x8xf32>
    %38 = arith.mulf %36, %37 : vector<8x8xf32>
    %39 = arith.addf %38, %13 : vector<8x8xf32>
    %cst_11 = arith.constant dense<0xFF800000> : vector<8xf32>
    %40 = vector.multi_reduction <maximumf>, %39, %cst_11 [1] : vector<8x8xf32> to vector<8xf32>
    %41 = vector.shape_cast %40 : vector<8xf32> to vector<8x1xf32>
    %42 = vector.broadcast %41 : vector<8x1xf32> to vector<8x8xf32>
    %43 = arith.subf %39, %42 : vector<8x8xf32>
    %44 = math.exp %43 : vector<8x8xf32>
    %cst_12 = arith.constant dense<0.000000e+00> : vector<8xf32>
    %45 = vector.multi_reduction <add>, %44, %cst_12 [1] : vector<8x8xf32> to vector<8xf32>
    %46 = vector.shape_cast %45 : vector<8xf32> to vector<8x1xf32>
    %47 = tpu.reciprocal %46 {approx = true} : vector<8x1xf32> -> vector<8x1xf32>
    %48 = vector.broadcast %47 : vector<8x1xf32> to vector<8x8xf32>
    %49 = arith.mulf %44, %48 : vector<8x8xf32>
    %cst_13 = arith.constant dense<0.000000e+00> : vector<8x8xf32>
    %50 = tpu.matmul %49, %24, %cst_13 {dimension_numbers = #tpu.dot_dimension_numbers<[1], [0], [0], [1], [0, 0, 1, 1], [], []>} : vector<8x8xf32>, vector<8x8xf32>, vector<8x8xf32> -> vector<8x8xf32>
    %51 = vector.extract_strided_slice %3 {offsets = [0, 8], sizes = [8, 8], strides = [1, 1]} : vector<8x32xf32> to vector<8x8xf32>
    %52 = vector.extract_strided_slice %51 {offsets = [0, 0], sizes = [8, 4], strides = [1, 1]} : vector<8x8xf32> to vector<8x4xf32>
    %53 = vector.extract_strided_slice %51 {offsets = [0, 4], sizes = [8, 4], strides = [1, 1]} : vector<8x8xf32> to vector<8x4xf32>
    %54 = arith.mulf %52, %6 : vector<8x4xf32>
    %55 = arith.mulf %53, %7 : vector<8x4xf32>
    %56 = arith.subf %54, %55 : vector<8x4xf32>
    %57 = arith.mulf %52, %7 : vector<8x4xf32>
    %58 = arith.mulf %53, %6 : vector<8x4xf32>
    %59 = arith.addf %57, %58 : vector<8x4xf32>
    %60 = tpu.concatenate %56, %59 in 1 : vector<8x4xf32>, vector<8x4xf32> -> vector<8x8xf32>
    %61 = tpu.transpose %23, [1, 0] : vector<8x8xf32> -> vector<8x8xf32>
    %cst_14 = arith.constant dense<0.000000e+00> : vector<8x8xf32>
    %62 = tpu.matmul %60, %61, %cst_14 {dimension_numbers = #tpu.dot_dimension_numbers<[1], [0], [0], [1], [0, 0, 1, 1], [], []>} : vector<8x8xf32>, vector<8x8xf32>, vector<8x8xf32> -> vector<8x8xf32>
    %cst_15 = arith.constant 0.353553385 : f32
    %63 = vector.broadcast %cst_15 : f32 to vector<8x8xf32>
    %64 = arith.mulf %62, %63 : vector<8x8xf32>
    %65 = arith.addf %64, %13 : vector<8x8xf32>
    %cst_16 = arith.constant dense<0xFF800000> : vector<8xf32>
    %66 = vector.multi_reduction <maximumf>, %65, %cst_16 [1] : vector<8x8xf32> to vector<8xf32>
    %67 = vector.shape_cast %66 : vector<8xf32> to vector<8x1xf32>
    %68 = vector.broadcast %67 : vector<8x1xf32> to vector<8x8xf32>
    %69 = arith.subf %65, %68 : vector<8x8xf32>
    %70 = math.exp %69 : vector<8x8xf32>
    %cst_17 = arith.constant dense<0.000000e+00> : vector<8xf32>
    %71 = vector.multi_reduction <add>, %70, %cst_17 [1] : vector<8x8xf32> to vector<8xf32>
    %72 = vector.shape_cast %71 : vector<8xf32> to vector<8x1xf32>
    %73 = tpu.reciprocal %72 {approx = true} : vector<8x1xf32> -> vector<8x1xf32>
    %74 = vector.broadcast %73 : vector<8x1xf32> to vector<8x8xf32>
    %75 = arith.mulf %70, %74 : vector<8x8xf32>
    %cst_18 = arith.constant dense<0.000000e+00> : vector<8x8xf32>
    %76 = tpu.matmul %75, %24, %cst_18 {dimension_numbers = #tpu.dot_dimension_numbers<[1], [0], [0], [1], [0, 0, 1, 1], [], []>} : vector<8x8xf32>, vector<8x8xf32>, vector<8x8xf32> -> vector<8x8xf32>
    %77 = vector.extract_strided_slice %4 {offsets = [0, 8], sizes = [8, 8], strides = [1, 1]} : vector<8x16xf32> to vector<8x8xf32>
    %78 = vector.extract_strided_slice %77 {offsets = [0, 0], sizes = [8, 4], strides = [1, 1]} : vector<8x8xf32> to vector<8x4xf32>
    %79 = vector.extract_strided_slice %77 {offsets = [0, 4], sizes = [8, 4], strides = [1, 1]} : vector<8x8xf32> to vector<8x4xf32>
    %80 = arith.mulf %78, %6 : vector<8x4xf32>
    %81 = arith.mulf %79, %7 : vector<8x4xf32>
    %82 = arith.subf %80, %81 : vector<8x4xf32>
    %83 = arith.mulf %78, %7 : vector<8x4xf32>
    %84 = arith.mulf %79, %6 : vector<8x4xf32>
    %85 = arith.addf %83, %84 : vector<8x4xf32>
    %86 = tpu.concatenate %82, %85 in 1 : vector<8x4xf32>, vector<8x4xf32> -> vector<8x8xf32>
    %87 = vector.extract_strided_slice %5 {offsets = [0, 8], sizes = [8, 8], strides = [1, 1]} : vector<8x16xf32> to vector<8x8xf32>
    %88 = vector.extract_strided_slice %3 {offsets = [0, 16], sizes = [8, 8], strides = [1, 1]} : vector<8x32xf32> to vector<8x8xf32>
    %89 = vector.extract_strided_slice %88 {offsets = [0, 0], sizes = [8, 4], strides = [1, 1]} : vector<8x8xf32> to vector<8x4xf32>
    %90 = vector.extract_strided_slice %88 {offsets = [0, 4], sizes = [8, 4], strides = [1, 1]} : vector<8x8xf32> to vector<8x4xf32>
    %91 = arith.mulf %89, %6 : vector<8x4xf32>
    %92 = arith.mulf %90, %7 : vector<8x4xf32>
    %93 = arith.subf %91, %92 : vector<8x4xf32>
    %94 = arith.mulf %89, %7 : vector<8x4xf32>
    %95 = arith.mulf %90, %6 : vector<8x4xf32>
    %96 = arith.addf %94, %95 : vector<8x4xf32>
    %97 = tpu.concatenate %93, %96 in 1 : vector<8x4xf32>, vector<8x4xf32> -> vector<8x8xf32>
    %98 = tpu.transpose %86, [1, 0] : vector<8x8xf32> -> vector<8x8xf32>
    %cst_19 = arith.constant dense<0.000000e+00> : vector<8x8xf32>
    %99 = tpu.matmul %97, %98, %cst_19 {dimension_numbers = #tpu.dot_dimension_numbers<[1], [0], [0], [1], [0, 0, 1, 1], [], []>} : vector<8x8xf32>, vector<8x8xf32>, vector<8x8xf32> -> vector<8x8xf32>
    %cst_20 = arith.constant 0.353553385 : f32
    %100 = vector.broadcast %cst_20 : f32 to vector<8x8xf32>
    %101 = arith.mulf %99, %100 : vector<8x8xf32>
    %102 = arith.addf %101, %13 : vector<8x8xf32>
    %cst_21 = arith.constant dense<0xFF800000> : vector<8xf32>
    %103 = vector.multi_reduction <maximumf>, %102, %cst_21 [1] : vector<8x8xf32> to vector<8xf32>
    %104 = vector.shape_cast %103 : vector<8xf32> to vector<8x1xf32>
    %105 = vector.broadcast %104 : vector<8x1xf32> to vector<8x8xf32>
    %106 = arith.subf %102, %105 : vector<8x8xf32>
    %107 = math.exp %106 : vector<8x8xf32>
    %cst_22 = arith.constant dense<0.000000e+00> : vector<8xf32>
    %108 = vector.multi_reduction <add>, %107, %cst_22 [1] : vector<8x8xf32> to vector<8xf32>
    %109 = vector.shape_cast %108 : vector<8xf32> to vector<8x1xf32>
    %110 = tpu.reciprocal %109 {approx = true} : vector<8x1xf32> -> vector<8x1xf32>
    %111 = vector.broadcast %110 : vector<8x1xf32> to vector<8x8xf32>
    %112 = arith.mulf %107, %111 : vector<8x8xf32>
    %cst_23 = arith.constant dense<0.000000e+00> : vector<8x8xf32>
    %113 = tpu.matmul %112, %87, %cst_23 {dimension_numbers = #tpu.dot_dimension_numbers<[1], [0], [0], [1], [0, 0, 1, 1], [], []>} : vector<8x8xf32>, vector<8x8xf32>, vector<8x8xf32> -> vector<8x8xf32>
    %114 = vector.extract_strided_slice %3 {offsets = [0, 24], sizes = [8, 8], strides = [1, 1]} : vector<8x32xf32> to vector<8x8xf32>
    %115 = vector.extract_strided_slice %114 {offsets = [0, 0], sizes = [8, 4], strides = [1, 1]} : vector<8x8xf32> to vector<8x4xf32>
    %116 = vector.extract_strided_slice %114 {offsets = [0, 4], sizes = [8, 4], strides = [1, 1]} : vector<8x8xf32> to vector<8x4xf32>
    %117 = arith.mulf %115, %6 : vector<8x4xf32>
    %118 = arith.mulf %116, %7 : vector<8x4xf32>
    %119 = arith.subf %117, %118 : vector<8x4xf32>
    %120 = arith.mulf %115, %7 : vector<8x4xf32>
    %121 = arith.mulf %116, %6 : vector<8x4xf32>
    %122 = arith.addf %120, %121 : vector<8x4xf32>
    %123 = tpu.concatenate %119, %122 in 1 : vector<8x4xf32>, vector<8x4xf32> -> vector<8x8xf32>
    %124 = tpu.transpose %86, [1, 0] : vector<8x8xf32> -> vector<8x8xf32>
    %cst_24 = arith.constant dense<0.000000e+00> : vector<8x8xf32>
    %125 = tpu.matmul %123, %124, %cst_24 {dimension_numbers = #tpu.dot_dimension_numbers<[1], [0], [0], [1], [0, 0, 1, 1], [], []>} : vector<8x8xf32>, vector<8x8xf32>, vector<8x8xf32> -> vector<8x8xf32>
    %cst_25 = arith.constant 0.353553385 : f32
    %126 = vector.broadcast %cst_25 : f32 to vector<8x8xf32>
    %127 = arith.mulf %125, %126 : vector<8x8xf32>
    %128 = arith.addf %127, %13 : vector<8x8xf32>
    %cst_26 = arith.constant dense<0xFF800000> : vector<8xf32>
    %129 = vector.multi_reduction <maximumf>, %128, %cst_26 [1] : vector<8x8xf32> to vector<8xf32>
    %130 = vector.shape_cast %129 : vector<8xf32> to vector<8x1xf32>
    %131 = vector.broadcast %130 : vector<8x1xf32> to vector<8x8xf32>
    %132 = arith.subf %128, %131 : vector<8x8xf32>
    %133 = math.exp %132 : vector<8x8xf32>
    %cst_27 = arith.constant dense<0.000000e+00> : vector<8xf32>
    %134 = vector.multi_reduction <add>, %133, %cst_27 [1] : vector<8x8xf32> to vector<8xf32>
    %135 = vector.shape_cast %134 : vector<8xf32> to vector<8x1xf32>
    %136 = tpu.reciprocal %135 {approx = true} : vector<8x1xf32> -> vector<8x1xf32>
    %137 = vector.broadcast %136 : vector<8x1xf32> to vector<8x8xf32>
    %138 = arith.mulf %133, %137 : vector<8x8xf32>
    %cst_28 = arith.constant dense<0.000000e+00> : vector<8x8xf32>
    %139 = tpu.matmul %138, %87, %cst_28 {dimension_numbers = #tpu.dot_dimension_numbers<[1], [0], [0], [1], [0, 0, 1, 1], [], []>} : vector<8x8xf32>, vector<8x8xf32>, vector<8x8xf32> -> vector<8x8xf32>
    %140 = tpu.concatenate %50, %76, %113, %139 in 1 : vector<8x8xf32>, vector<8x8xf32>, vector<8x8xf32>, vector<8x8xf32> -> vector<8x32xf32>
    %c0_29 = arith.constant 0 : index
    %c0_30 = arith.constant 0 : index
    %141 = vector.load %arg2[%c0_29, %c0_30] : memref<32x32xf32, #tpu.memory_space<vmem>>, vector<32x32xf32>
    %cst_31 = arith.constant dense<0.000000e+00> : vector<8x32xf32>
    %142 = tpu.matmul %140, %141, %cst_31 {dimension_numbers = #tpu.dot_dimension_numbers<[1], [0], [0], [1], [0, 0, 1, 1], [], []>} : vector<8x32xf32>, vector<32x32xf32>, vector<8x32xf32> -> vector<8x32xf32>
    %c0_32 = arith.constant 0 : index
    %c0_33 = arith.constant 0 : index
    %143 = vector.load %arg5[%c0_32, %c0_33] : memref<8x32xf32, #tpu.memory_space<vmem>>, vector<8x32xf32>
    tpu.vector_store %arg5[%c0_32, %c0_33], %142 {strides = array<i32>} : memref<8x32xf32, #tpu.memory_space<vmem>>, vector<8x32xf32>,
    return
  }
}

</mosaic_0001>

<llo_original>
// kernel: tpu_custom_call.1
$region0: #{tpu_custom_call.1}
  #allocation0 [shape = 'u32[]', space=smem, size = 0x4, offset = 0x4, fixed_abs, tag = 'smem constant byte address 0x4 - core index']
  #allocation1 [shape = 'u32[144,128]{1,0:T(1,128)}', space=vmem, size = 0x12000, scoped, tag = 'internal scratch']
  %s0 = inlined_call_operand.vmem [shape: f32[8,32], index: 0, kind: input, shape index: {}]
  %s1 = inlined_call_operand.hbm [shape: f32[32,64], index: 1, kind: input, shape index: {}]
  %s2 = inlined_call_operand.hbm [shape: f32[32,32], index: 2, kind: input, shape index: {}]
  %s3 = inlined_call_operand.vmem [shape: f32[8,4], index: 3, kind: input, shape index: {}]
  %s4 = inlined_call_operand.vmem [shape: f32[8,4], index: 4, kind: input, shape index: {}]
  %s5 = inlined_call_operand.hbm [shape: f32[8,32], index: 5, kind: output, shape index: {}]
  %s6 = sld [smem:[#allocation0]]
  $region38: #{tpu_custom_call.1} parent=0
    _
  %s8 = ssub.s32 1, %s6
  %s9 = scalar_select 0, %s8, %s6
  $region1: #{tpu_custom_call.1} parent=0
    #allocation2 [shape = 'u8[16384]{0}', space=vmem, size = 0x4000, scoped, tag = 'input window, operand 1, single buffered']
    #allocation3 [shape = 's32[1]{0}', space=sflag, size = 0x4, scoped, tag = 'scoped memory for tpu_custom_call.1']
    #allocation4 [shape = 's32[1]{0}', space=sflag, size = 0x4, scoped, tag = 'scoped memory for tpu_custom_call.1']
    #allocation5 [shape = 'u8[16384]{0}', space=vmem, size = 0x4000, scoped, tag = 'input window, operand 2, single buffered']
    #allocation6 [shape = 's32[1]{0}', space=sflag, size = 0x4, scoped, tag = 'scoped memory for tpu_custom_call.1']
    #allocation7 [shape = 'u8[4096]{0}', space=vmem, size = 0x1000, scoped, tag = 'output window, operand 0, single buffered']
    %10 = vsyncpa [#allocation3], 0
    %11 = vsyncpa [#allocation6], 0
    %12 = vsyncpa [#allocation4], 0
    // Predicated region
    $region2: #{tpu_custom_call.1} parent=1 // pred_check
      _
    $region3: #{tpu_custom_call.1} parent=1 // pred_check_branch
      %14 = sbr.rel (0) target = $region5
    $region4: #{tpu_custom_call.1} parent=1 // pred_region
      _
    $region5: #{tpu_custom_call.1} parent=1 // pred_fallthru
      _
    // Predicated region
    $region6: #{tpu_custom_call.1} parent=1 // pred_check
      _
    $region7: #{tpu_custom_call.1} parent=1 // pred_check_branch
      %16 = sbr.rel (0) target = $region9
    $region8: #{tpu_custom_call.1} parent=1 // pred_region
      %s18 = ssub.s32 512, 512
      %19 = vsyncadd [#allocation3], %s18
      %s20 = sshll.u32 [#allocation2], 4
      %s21 = int_to_ptr.vmem [resolvable:$true] %s20
      %26 = dma.hbm_to_vmem [thread:$0]  %s1, 512, %s21, [#allocation3], 128, 128, 8
    $region9: #{tpu_custom_call.1} parent=1 // pred_fallthru
      _
    // Predicated region
    $region10: #{tpu_custom_call.1} parent=1 // pred_check
      _
    $region11: #{tpu_custom_call.1} parent=1 // pred_check_branch
      %28 = sbr.rel (0) target = $region13
    $region12: #{tpu_custom_call.1} parent=1 // pred_region
      %s30 = ssub.s32 512, 512
      %31 = vsyncadd [#allocation6], %s30
      %s32 = sshll.u32 [#allocation5], 4
      %s33 = int_to_ptr.vmem [resolvable:$true] %s32
      %38 = dma.hbm_to_vmem [thread:$0]  %s2, 512, %s33, [#allocation6], 128, 128, 8
    $region13: #{tpu_custom_call.1} parent=1 // pred_fallthru
      _
    // Predicated region
    $region14: #{tpu_custom_call.1} parent=1 // pred_check
      _
    $region15: #{tpu_custom_call.1} parent=1 // pred_check_branch
      %40 = sbr.rel (0) target = $region17
    $region16: #{tpu_custom_call.1} parent=1 // pred_region
      _
    $region17: #{tpu_custom_call.1} parent=1 // pred_fallthru
      _
    // Predicated region
    $region18: #{tpu_custom_call.1} parent=1 // pred_check
      _
    $region19: #{tpu_custom_call.1} parent=1 // pred_check_branch
      %42 = sbr.rel (0) target = $region21
    $region20: #{tpu_custom_call.1} parent=1 // pred_region
      _
    $region21: #{tpu_custom_call.1} parent=1 // pred_fallthru
      _
    // Predicated region
    $region22: #{tpu_custom_call.1} parent=1 // pred_check
      _
    $region23: #{tpu_custom_call.1} parent=1 // pred_check_branch
      %44 = sbr.rel (0) target = $region25
    $region24: #{tpu_custom_call.1} parent=1 // pred_region
      %45 = dma.done [#allocation3], 512
    $region25: #{tpu_custom_call.1} parent=1 // pred_fallthru
      _
    // Predicated region
    $region26: #{tpu_custom_call.1} parent=1 // pred_check
      _
    $region27: #{tpu_custom_call.1} parent=1 // pred_check_branch
      %47 = sbr.rel (0) target = $region29
    $region28: #{tpu_custom_call.1} parent=1 // pred_region
      %48 = dma.done [#allocation6], 512
    $region29: #{tpu_custom_call.1} parent=1 // pred_fallthru
      _
    %v49 = vld [vmem:[%s0] sm:$0xff]
    %v50 = vld [vmem:[#allocation2] sm:$0xff]
    %v51 = vld [vmem:[#allocation2 + $0x8] sm:$0xff]
    %v52 = vld [vmem:[#allocation2 + $0x10] sm:$0xff]
    %v53 = vld [vmem:[#allocation2 + $0x18] sm:$0xff]
    %vm54 = vcmask 261120
    %v56 = vsel %vm54, %v49, 0
    %58 = vmatprep.subr.mxu0 0.0
    %59 = vmatpush1.msra.mxu0 %v50
    %60 = vmatprep.subr.mxu0 0.0
    %61 = vmatpush1.msra.mxu0 %v51
    %62 = vmatprep.subr.mxu0 0.0
    %63 = vmatpush1.msra.mxu0 %v52
    %64 = vmatprep.subr.mxu0 0.0
    %65 = vmatpush1.msra.mxu0 %v53
    %66 = vmatprep.subr.mxu0 0.0
    %67 = vmatpush1.msra.mxu0 0.0
    %68 = vmatprep.subr.mxu0 0.0
    %69 = vmatpush1.msra.mxu0 0.0
    %70 = vmatprep.subr.mxu0 0.0
    %71 = vmatpush1.msra.mxu0 0.0
    %72 = vmatprep.subr.mxu0 0.0
    %73 = vmatpush1.msra.mxu0 0.0
    %74 = vmatprep.subr.mxu0 0.0
    %75 = vmatpush1.msra.mxu0 0.0
    %76 = vmatprep.subr.mxu0 0.0
    %77 = vmatpush1.msra.mxu0 0.0
    %78 = vmatprep.subr.mxu0 0.0
    %79 = vmatpush1.msra.mxu0 0.0
    %80 = vmatprep.subr.mxu0 0.0
    %81 = vmatpush1.msra.mxu0 0.0
    %82 = vmatprep.subr.mxu0 0.0
    %83 = vmatpush1.msra.mxu0 0.0
    %84 = vmatprep.subr.mxu0 0.0
    %85 = vmatpush1.msra.mxu0 0.0
    %86 = vmatprep.subr.mxu0 0.0
    %87 = vmatpush1.msra.mxu0 0.0
    %88 = vmatprep.subr.mxu0 0.0
    %89 = vmatpush1.msra.mxu0 0.0
    %90 = vmatprep.subr.mxu0 0.0
    %91 = vmatpush1.msra.mxu0 0.0
    %92 = vmatprep.subr.mxu0 0.0
    %93 = vmatpush1.msra.mxu0 0.0
    %94 = vmatprep.subr.mxu0 0.0
    %95 = vmatpush1.msra.mxu0 0.0
    %96 = vmatprep.subr.mxu0 0.0
    %97 = vmatpush1.msra.mxu0 0.0
    %98 = vmatprep.subr.mxu0 0.0
    %99 = vmatpush1.msra.mxu0 0.0
    %100 = vmatprep.subr.mxu0 0.0
    %101 = vmatpush1.msra.mxu0 0.0
    %102 = vmatprep.subr.mxu0 0.0
    %103 = vmatpush1.msra.mxu0 0.0
    %104 = vmatprep.subr.mxu0 0.0
    %105 = vmatpush1.msra.mxu0 0.0
    %106 = vmatprep.subr.mxu0 0.0
    %107 = vmatpush1.msra.mxu0 0.0
    %108 = vmatprep.subr.mxu0 0.0
    %109 = vmatpush1.msra.mxu0 0.0
    %110 = vmatprep.subr.mxu0 0.0
    %111 = vmatpush1.msra.mxu0 0.0
    %112 = vmatprep.subr.mxu0 0.0
    %113 = vmatpush1.msra.mxu0 0.0
    %114 = vmatprep.subr.mxu0 0.0
    %115 = vmatpush1.msra.mxu0 0.0
    %116 = vmatprep.subr.mxu0 0.0
    %117 = vmatpush1.msra.mxu0 0.0
    %118 = vmatprep.subr.mxu0 0.0
    %119 = vmatpush1.msra.mxu0 0.0
    %120 = vmatprep.subr.mxu0 0.0
    %121 = vmatpush1.msra.mxu0 0.0
    %122 = vmatprep.mubr.f32.mxu0 0.0
    %123 = vmatmul.mubr.f32.gmra.mrb[0].mxu0 %v56
    %v124 = vpop.f32.mrb[0].mxu0
    %v125 = vadd.f32 0.0, %v124
    %v126 = vpop.f32.mrb[0].mxu0
    %127 = vdwg.mxu0
    %v128 = vld [vmem:[%s3] sm:$0xff]
    %v129 = vld [vmem:[%s4] sm:$0xff]
    %v130 = vlaneseq
    %v131 = vshrl.u32 %v130, 7
    %v132 = vlaneseq
    %v133 = vand.u32 %v132, 127
    %vm134 = vcmp.le.s32.totalorder %v133, %v131
    %v135 = vsel %vm134, 0.0, -inf
    %137 = vrot.lane.b32.xlu0 %v128, 32
    %v138 = vpop.permute.xlu0 %137
    %v140 = vmul.f32 %v125, %v138
    %142 = vrot.lane.b32.xlu0 %v129, 36
    %v143 = vpop.permute.xlu0 %142
    %v145 = vmul.f32 %v125, %v143
    %147 = vrot.lane.b32.xlu0 %v145, 124
    %v148 = vpop.permute.xlu0 %147
    %v150 = vsub.f32 %v140, %v148
    %151 = vrot.lane.b32.xlu0 %v129, 32
    %v152 = vpop.permute.xlu0 %151
    %v154 = vmul.f32 %v125, %v152
    %155 = vrot.lane.b32.xlu0 %v128, 36
    %v156 = vpop.permute.xlu0 %155
    %v158 = vmul.f32 %v125, %v156
    %160 = vrot.lane.b32.xlu0 %v158, 124
    %v161 = vpop.permute.xlu0 %160
    %v163 = vadd.f32 %v154, %v161
    %165 = vrot.lane.b32.xlu0 %v150, 96
    %v166 = vpop.permute.xlu0 %165
    %169 = vrot.lane.b32.xlu0 %v163, 100
    %v170 = vpop.permute.xlu0 %169
    %vm172 = vcmask 31744
    %v173 = vsel %vm172, %v166, %v170
    %v174 = vmul.f32 %v125, %v128
    %175 = vrot.lane.b32.xlu0 %v129, 4
    %v176 = vpop.permute.xlu0 %175
    %v178 = vmul.f32 %v125, %v176
    %180 = vrot.lane.b32.xlu0 %v178, 124
    %v181 = vpop.permute.xlu0 %180
    %v183 = vsub.f32 %v174, %v181
    %v184 = vmul.f32 %v125, %v129
    %185 = vrot.lane.b32.xlu0 %v128, 4
    %v186 = vpop.permute.xlu0 %185
    %v188 = vmul.f32 %v125, %v186
    %190 = vrot.lane.b32.xlu0 %v188, 124
    %v191 = vpop.permute.xlu0 %190
    %v193 = vadd.f32 %v184, %v191
    %195 = vrot.lane.b32.xlu0 %v193, 4
    %v196 = vpop.permute.xlu0 %195
    %v198 = vsel %vm172, %v183, %v196
    %vm199 = vcmask 64512
    %v201 = vsel %vm199, %v198, 0
    %v204 = vsel %vm199, %v173, 0
    %206 = vmatprep.subr.mxu0 0.0
    %207 = vmatpush1.xpose.msra.mxu0 %v204
    %208 = vmatprep.subr.mxu0 0.0
    %209 = vmatpush1.xpose.msra.mxu0 0.0
    %210 = vmatprep.subr.mxu0 0.0
    %211 = vmatpush1.xpose.msra.mxu0 0.0
    %212 = vmatprep.subr.mxu0 0.0
    %213 = vmatpush1.xpose.msra.mxu0 0.0
    %214 = vmatprep.subr.mxu0 0.0
    %215 = vmatpush1.xpose.msra.mxu0 0.0
    %216 = vmatprep.subr.mxu0 0.0
    %217 = vmatpush1.xpose.msra.mxu0 0.0
    %218 = vmatprep.subr.mxu0 0.0
    %219 = vmatpush1.xpose.msra.mxu0 0.0
    %220 = vmatprep.subr.mxu0 0.0
    %221 = vmatpush1.xpose.msra.mxu0 0.0
    %222 = vmatprep.subr.mxu0 0.0
    %223 = vmatpush1.xpose.msra.mxu0 0.0
    %224 = vmatprep.subr.mxu0 0.0
    %225 = vmatpush1.xpose.msra.mxu0 0.0
    %226 = vmatprep.subr.mxu0 0.0
    %227 = vmatpush1.xpose.msra.mxu0 0.0
    %228 = vmatprep.subr.mxu0 0.0
    %229 = vmatpush1.xpose.msra.mxu0 0.0
    %230 = vmatprep.subr.mxu0 0.0
    %231 = vmatpush1.xpose.msra.mxu0 0.0
    %232 = vmatprep.subr.mxu0 0.0
    %233 = vmatpush1.xpose.msra.mxu0 0.0
    %234 = vmatprep.subr.mxu0 0.0
    %235 = vmatpush1.xpose.msra.mxu0 0.0
    %236 = vmatprep.subr.mxu0 0.0
    %237 = vmatpush1.xpose.msra.mxu0 0.0
    %238 = vmatprep.subr.mxu0 0.0
    %239 = vmatpush1.xpose.msra.mxu0 0.0
    %240 = vmatprep.subr.mxu0 0.0
    %241 = vmatpush1.xpose.msra.mxu0 0.0
    %242 = vmatprep.subr.mxu0 0.0
    %243 = vmatpush1.xpose.msra.mxu0 0.0
    %244 = vmatprep.subr.mxu0 0.0
    %245 = vmatpush1.xpose.msra.mxu0 0.0
    %246 = vmatprep.subr.mxu0 0.0
    %247 = vmatpush1.xpose.msra.mxu0 0.0
    %248 = vmatprep.subr.mxu0 0.0
    %249 = vmatpush1.xpose.msra.mxu0 0.0
    %250 = vmatprep.subr.mxu0 0.0
    %251 = vmatpush1.xpose.msra.mxu0 0.0
    %252 = vmatprep.subr.mxu0 0.0
    %253 = vmatpush1.xpose.msra.mxu0 0.0
    %254 = vmatprep.subr.mxu0 0.0
    %255 = vmatpush1.xpose.msra.mxu0 0.0
    %256 = vmatprep.subr.mxu0 0.0
    %257 = vmatpush1.xpose.msra.mxu0 0.0
    %258 = vmatprep.subr.mxu0 0.0
    %259 = vmatpush1.xpose.msra.mxu0 0.0
    %260 = vmatprep.subr.mxu0 0.0
    %261 = vmatpush1.xpose.msra.mxu0 0.0
    %262 = vmatprep.subr.mxu0 0.0
    %263 = vmatpush1.xpose.msra.mxu0 0.0
    %264 = vmatprep.subr.mxu0 0.0
    %265 = vmatpush1.xpose.msra.mxu0 0.0
    %266 = vmatprep.subr.mxu0 0.0
    %267 = vmatpush1.xpose.msra.mxu0 0.0
    %268 = vmatprep.subr.mxu0 0.0
    %269 = vmatpush1.xpose.msra.mxu0 0.0
    %270 = vmatprep.mubr.f32.mxu0 0.0
    %271 = vmatmul.mubr.f32.gmra.mrb[0].mxu0 %v201
    %v272 = vpop.f32.mrb[0].mxu0
    %v273 = vadd.f32 0.0, %v272
    %v274 = vpop.f32.mrb[0].mxu0
    %275 = vdwg.mxu0
    %v276 = vmul.f32 %v273, 0.35355338
    %v277 = vadd.f32 %v276, %v135
    %v278 = vsel %vm199, %v277, -inf
    %279 = vmax.xlane.f32.xlu0 %v278
    %v280 = vpop.xlane.xlu0 %279
    %v281 = vsub.f32 %v277, %v280
    %v282 = vmul.f32 %v281, 1.442695
    %v283 = vpow.pop %v282
    %v284 = vsel %vm199, %v283, 0.0
    %285 = vadd.xlane.f32.xlu0 %v284
    %v286 = vpop.xlane.xlu0 %285
    %v287 = vrcp.pop %v286
    %v288 = vmul.f32 %v283, %v287
    %290 = vrot.lane.b32.xlu0 %v125, 80
    %v291 = vpop.permute.xlu0 %290
    %v294 = vsel %vm199, %v288, 0
    %296 = vmatprep.subr.mxu0 0.0
    %297 = vmatpush1.msra.mxu0 %v291
    %298 = vmatprep.subr.mxu0 0.0
    %299 = vmatpush1.msra.mxu0 0.0
    %300 = vmatprep.subr.mxu0 0.0
    %301 = vmatpush1.msra.mxu0 0.0
    %302 = vmatprep.subr.mxu0 0.0
    %303 = vmatpush1.msra.mxu0 0.0
    %304 = vmatprep.subr.mxu0 0.0
    %305 = vmatpush1.msra.mxu0 0.0
    %306 = vmatprep.subr.mxu0 0.0
    %307 = vmatpush1.msra.mxu0 0.0
    %308 = vmatprep.subr.mxu0 0.0
    %309 = vmatpush1.msra.mxu0 0.0
    %310 = vmatprep.subr.mxu0 0.0
    %311 = vmatpush1.msra.mxu0 0.0
    %312 = vmatprep.subr.mxu0 0.0
    %313 = vmatpush1.msra.mxu0 0.0
    %314 = vmatprep.subr.mxu0 0.0
    %315 = vmatpush1.msra.mxu0 0.0
    %316 = vmatprep.subr.mxu0 0.0
    %317 = vmatpush1.msra.mxu0 0.0
    %318 = vmatprep.subr.mxu0 0.0
    %319 = vmatpush1.msra.mxu0 0.0
    %320 = vmatprep.subr.mxu0 0.0
    %321 = vmatpush1.msra.mxu0 0.0
    %322 = vmatprep.subr.mxu0 0.0
    %323 = vmatpush1.msra.mxu0 0.0
    %324 = vmatprep.subr.mxu0 0.0
    %325 = vmatpush1.msra.mxu0 0.0
    %326 = vmatprep.subr.mxu0 0.0
    %327 = vmatpush1.msra.mxu0 0.0
    %328 = vmatprep.subr.mxu0 0.0
    %329 = vmatpush1.msra.mxu0 0.0
    %330 = vmatprep.subr.mxu0 0.0
    %331 = vmatpush1.msra.mxu0 0.0
    %332 = vmatprep.subr.mxu0 0.0
    %333 = vmatpush1.msra.mxu0 0.0
    %334 = vmatprep.subr.mxu0 0.0
    %335 = vmatpush1.msra.mxu0 0.0
    %336 = vmatprep.subr.mxu0 0.0
    %337 = vmatpush1.msra.mxu0 0.0
    %338 = vmatprep.subr.mxu0 0.0
    %339 = vmatpush1.msra.mxu0 0.0
    %340 = vmatprep.subr.mxu0 0.0
    %341 = vmatpush1.msra.mxu0 0.0
    %342 = vmatprep.subr.mxu0 0.0
    %343 = vmatpush1.msra.mxu0 0.0
    %344 = vmatprep.subr.mxu0 0.0
    %345 = vmatpush1.msra.mxu0 0.0
    %346 = vmatprep.subr.mxu0 0.0
    %347 = vmatpush1.msra.mxu0 0.0
    %348 = vmatprep.subr.mxu0 0.0
    %349 = vmatpush1.msra.mxu0 0.0
    %350 = vmatprep.subr.mxu0 0.0
    %351 = vmatpush1.msra.mxu0 0.0
    %352 = vmatprep.subr.mxu0 0.0
    %353 = vmatpush1.msra.mxu0 0.0
    %354 = vmatprep.subr.mxu0 0.0
    %355 = vmatpush1.msra.mxu0 0.0
    %356 = vmatprep.subr.mxu0 0.0
    %357 = vmatpush1.msra.mxu0 0.0
    %358 = vmatprep.subr.mxu0 0.0
    %359 = vmatpush1.msra.mxu0 0.0
    %360 = vmatprep.mubr.f32.mxu0 0.0
    %361 = vmatmul.mubr.f32.gmra.mrb[0].mxu0 %v294
    %v362 = vpop.f32.mrb[0].mxu0
    %v363 = vadd.f32 0.0, %v362
    %v364 = vpop.f32.mrb[0].mxu0
    %365 = vdwg.mxu0
    %366 = vrot.lane.b32.xlu0 %v128, 8
    %v367 = vpop.permute.xlu0 %366
    %v369 = vmul.f32 %v125, %v367
    %370 = vrot.lane.b32.xlu0 %v129, 12
    %v371 = vpop.permute.xlu0 %370
    %v373 = vmul.f32 %v125, %v371
    %375 = vrot.lane.b32.xlu0 %v373, 124
    %v376 = vpop.permute.xlu0 %375
    %v378 = vsub.f32 %v369, %v376
    %379 = vrot.lane.b32.xlu0 %v129, 8
    %v380 = vpop.permute.xlu0 %379
    %v382 = vmul.f32 %v125, %v380
    %383 = vrot.lane.b32.xlu0 %v128, 12
    %v384 = vpop.permute.xlu0 %383
    %v386 = vmul.f32 %v125, %v384
    %388 = vrot.lane.b32.xlu0 %v386, 124
    %v389 = vpop.permute.xlu0 %388
    %v391 = vadd.f32 %v382, %v389
    %393 = vrot.lane.b32.xlu0 %v378, 120
    %v394 = vpop.permute.xlu0 %393
    %397 = vrot.lane.b32.xlu0 %v391, 124
    %v398 = vpop.permute.xlu0 %397
    %v400 = vsel %vm172, %v394, %v398
    %v402 = vsel %vm199, %v400, 0
    %404 = vmatprep.subr.mxu0 0.0
    %405 = vmatpush1.xpose.msra.mxu0 %v204
    %406 = vmatprep.subr.mxu0 0.0
    %407 = vmatpush1.xpose.msra.mxu0 0.0
    %408 = vmatprep.subr.mxu0 0.0
    %409 = vmatpush1.xpose.msra.mxu0 0.0
    %410 = vmatprep.subr.mxu0 0.0
    %411 = vmatpush1.xpose.msra.mxu0 0.0
    %412 = vmatprep.subr.mxu0 0.0
    %413 = vmatpush1.xpose.msra.mxu0 0.0
    %414 = vmatprep.subr.mxu0 0.0
    %415 = vmatpush1.xpose.msra.mxu0 0.0
    %416 = vmatprep.subr.mxu0 0.0
    %417 = vmatpush1.xpose.msra.mxu0 0.0
    %418 = vmatprep.subr.mxu0 0.0
    %419 = vmatpush1.xpose.msra.mxu0 0.0
    %420 = vmatprep.subr.mxu0 0.0
    %421 = vmatpush1.xpose.msra.mxu0 0.0
    %422 = vmatprep.subr.mxu0 0.0
    %423 = vmatpush1.xpose.msra.mxu0 0.0
    %424 = vmatprep.subr.mxu0 0.0
    %425 = vmatpush1.xpose.msra.mxu0 0.0
    %426 = vmatprep.subr.mxu0 0.0
    %427 = vmatpush1.xpose.msra.mxu0 0.0
    %428 = vmatprep.subr.mxu0 0.0
    %429 = vmatpush1.xpose.msra.mxu0 0.0
    %430 = vmatprep.subr.mxu0 0.0
    %431 = vmatpush1.xpose.msra.mxu0 0.0
    %432 = vmatprep.subr.mxu0 0.0
    %433 = vmatpush1.xpose.msra.mxu0 0.0
    %434 = vmatprep.subr.mxu0 0.0
    %435 = vmatpush1.xpose.msra.mxu0 0.0
    %436 = vmatprep.subr.mxu0 0.0
    %437 = vmatpush1.xpose.msra.mxu0 0.0
    %438 = vmatprep.subr.mxu0 0.0
    %439 = vmatpush1.xpose.msra.mxu0 0.0
    %440 = vmatprep.subr.mxu0 0.0
    %441 = vmatpush1.xpose.msra.mxu0 0.0
    %442 = vmatprep.subr.mxu0 0.0
    %443 = vmatpush1.xpose.msra.mxu0 0.0
    %444 = vmatprep.subr.mxu0 0.0
    %445 = vmatpush1.xpose.msra.mxu0 0.0
    %446 = vmatprep.subr.mxu0 0.0
    %447 = vmatpush1.xpose.msra.mxu0 0.0
    %448 = vmatprep.subr.mxu0 0.0
    %449 = vmatpush1.xpose.msra.mxu0 0.0
    %450 = vmatprep.subr.mxu0 0.0
    %451 = vmatpush1.xpose.msra.mxu0 0.0
    %452 = vmatprep.subr.mxu0 0.0
    %453 = vmatpush1.xpose.msra.mxu0 0.0
    %454 = vmatprep.subr.mxu0 0.0
    %455 = vmatpush1.xpose.msra.mxu0 0.0
    %456 = vmatprep.subr.mxu0 0.0
    %457 = vmatpush1.xpose.msra.mxu0 0.0
    %458 = vmatprep.subr.mxu0 0.0
    %459 = vmatpush1.xpose.msra.mxu0 0.0
    %460 = vmatprep.subr.mxu0 0.0
    %461 = vmatpush1.xpose.msra.mxu0 0.0
    %462 = vmatprep.subr.mxu0 0.0
    %463 = vmatpush1.xpose.msra.mxu0 0.0
    %464 = vmatprep.subr.mxu0 0.0
    %465 = vmatpush1.xpose.msra.mxu0 0.0
    %466 = vmatprep.subr.mxu0 0.0
    %467 = vmatpush1.xpose.msra.mxu0 0.0
    %468 = vmatprep.mubr.f32.mxu0 0.0
    %469 = vmatmul.mubr.f32.gmra.mrb[0].mxu0 %v402
    %v470 = vpop.f32.mrb[0].mxu0
    %v471 = vadd.f32 0.0, %v470
    %v472 = vpop.f32.mrb[0].mxu0
    %473 = vdwg.mxu0
    %v474 = vmul.f32 %v471, 0.35355338
    %v475 = vadd.f32 %v474, %v135
    %v476 = vsel %vm199, %v475, -inf
    %477 = vmax.xlane.f32.xlu0 %v476
    %v478 = vpop.xlane.xlu0 %477
    %v479 = vsub.f32 %v475, %v478
    %v480 = vmul.f32 %v479, 1.442695
    %v481 = vpow.pop %v480
    %v482 = vsel %vm199, %v481, 0.0
    %483 = vadd.xlane.f32.xlu0 %v482
    %v484 = vpop.xlane.xlu0 %483
    %v485 = vrcp.pop %v484
    %v486 = vmul.f32 %v481, %v485
    %v488 = vsel %vm199, %v486, 0
    %490 = vmatprep.subr.mxu0 0.0
    %491 = vmatpush1.msra.mxu0 %v291
    %492 = vmatprep.subr.mxu0 0.0
    %493 = vmatpush1.msra.mxu0 0.0
    %494 = vmatprep.subr.mxu0 0.0
    %495 = vmatpush1.msra.mxu0 0.0
    %496 = vmatprep.subr.mxu0 0.0
    %497 = vmatpush1.msra.mxu0 0.0
    %498 = vmatprep.subr.mxu0 0.0
    %499 = vmatpush1.msra.mxu0 0.0
    %500 = vmatprep.subr.mxu0 0.0
    %501 = vmatpush1.msra.mxu0 0.0
    %502 = vmatprep.subr.mxu0 0.0
    %503 = vmatpush1.msra.mxu0 0.0
    %504 = vmatprep.subr.mxu0 0.0
    %505 = vmatpush1.msra.mxu0 0.0
    %506 = vmatprep.subr.mxu0 0.0
    %507 = vmatpush1.msra.mxu0 0.0
    %508 = vmatprep.subr.mxu0 0.0
    %509 = vmatpush1.msra.mxu0 0.0
    %510 = vmatprep.subr.mxu0 0.0
    %511 = vmatpush1.msra.mxu0 0.0
    %512 = vmatprep.subr.mxu0 0.0
    %513 = vmatpush1.msra.mxu0 0.0
    %514 = vmatprep.subr.mxu0 0.0
    %515 = vmatpush1.msra.mxu0 0.0
    %516 = vmatprep.subr.mxu0 0.0
    %517 = vmatpush1.msra.mxu0 0.0
    %518 = vmatprep.subr.mxu0 0.0
    %519 = vmatpush1.msra.mxu0 0.0
    %520 = vmatprep.subr.mxu0 0.0
    %521 = vmatpush1.msra.mxu0 0.0
    %522 = vmatprep.subr.mxu0 0.0
    %523 = vmatpush1.msra.mxu0 0.0
    %524 = vmatprep.subr.mxu0 0.0
    %525 = vmatpush1.msra.mxu0 0.0
    %526 = vmatprep.subr.mxu0 0.0
    %527 = vmatpush1.msra.mxu0 0.0
    %528 = vmatprep.subr.mxu0 0.0
    %529 = vmatpush1.msra.mxu0 0.0
    %530 = vmatprep.subr.mxu0 0.0
    %531 = vmatpush1.msra.mxu0 0.0
    %532 = vmatprep.subr.mxu0 0.0
    %533 = vmatpush1.msra.mxu0 0.0
    %534 = vmatprep.subr.mxu0 0.0
    %535 = vmatpush1.msra.mxu0 0.0
    %536 = vmatprep.subr.mxu0 0.0
    %537 = vmatpush1.msra.mxu0 0.0
    %538 = vmatprep.subr.mxu0 0.0
    %539 = vmatpush1.msra.mxu0 0.0
    %540 = vmatprep.subr.mxu0 0.0
    %541 = vmatpush1.msra.mxu0 0.0
    %542 = vmatprep.subr.mxu0 0.0
    %543 = vmatpush1.msra.mxu0 0.0
    %544 = vmatprep.subr.mxu0 0.0
    %545 = vmatpush1.msra.mxu0 0.0
    %546 = vmatprep.subr.mxu0 0.0
    %547 = vmatpush1.msra.mxu0 0.0
    %548 = vmatprep.subr.mxu0 0.0
    %549 = vmatpush1.msra.mxu0 0.0
    %550 = vmatprep.subr.mxu0 0.0
    %551 = vmatpush1.msra.mxu0 0.0
    %552 = vmatprep.subr.mxu0 0.0
    %553 = vmatpush1.msra.mxu0 0.0
    %554 = vmatprep.mubr.f32.mxu0 0.0
    %555 = vmatmul.mubr.f32.gmra.mrb[0].mxu0 %v488
    %v556 = vpop.f32.mrb[0].mxu0
    %v557 = vadd.f32 0.0, %v556
    %v558 = vpop.f32.mrb[0].mxu0
    %559 = vdwg.mxu0
    %560 = vrot.lane.b32.xlu0 %v128, 40
    %v561 = vpop.permute.xlu0 %560
    %v563 = vmul.f32 %v125, %v561
    %564 = vrot.lane.b32.xlu0 %v129, 44
    %v565 = vpop.permute.xlu0 %564
    %v567 = vmul.f32 %v125, %v565
    %569 = vrot.lane.b32.xlu0 %v567, 124
    %v570 = vpop.permute.xlu0 %569
    %v572 = vsub.f32 %v563, %v570
    %573 = vrot.lane.b32.xlu0 %v129, 40
    %v574 = vpop.permute.xlu0 %573
    %v576 = vmul.f32 %v125, %v574
    %577 = vrot.lane.b32.xlu0 %v128, 44
    %v578 = vpop.permute.xlu0 %577
    %v580 = vmul.f32 %v125, %v578
    %582 = vrot.lane.b32.xlu0 %v580, 124
    %v583 = vpop.permute.xlu0 %582
    %v585 = vadd.f32 %v576, %v583
    %587 = vrot.lane.b32.xlu0 %v572, 88
    %v588 = vpop.permute.xlu0 %587
    %591 = vrot.lane.b32.xlu0 %v585, 92
    %v592 = vpop.permute.xlu0 %591
    %v594 = vsel %vm172, %v588, %v592
    %595 = vrot.lane.b32.xlu0 %v128, 16
    %v596 = vpop.permute.xlu0 %595
    %v598 = vmul.f32 %v125, %v596
    %599 = vrot.lane.b32.xlu0 %v129, 20
    %v600 = vpop.permute.xlu0 %599
    %v602 = vmul.f32 %v125, %v600
    %604 = vrot.lane.b32.xlu0 %v602, 124
    %v605 = vpop.permute.xlu0 %604
    %v607 = vsub.f32 %v598, %v605
    %608 = vrot.lane.b32.xlu0 %v129, 16
    %v609 = vpop.permute.xlu0 %608
    %v611 = vmul.f32 %v125, %v609
    %612 = vrot.lane.b32.xlu0 %v128, 20
    %v613 = vpop.permute.xlu0 %612
    %v615 = vmul.f32 %v125, %v613
    %617 = vrot.lane.b32.xlu0 %v615, 124
    %v618 = vpop.permute.xlu0 %617
    %v620 = vadd.f32 %v611, %v618
    %622 = vrot.lane.b32.xlu0 %v607, 112
    %v623 = vpop.permute.xlu0 %622
    %626 = vrot.lane.b32.xlu0 %v620, 116
    %v627 = vpop.permute.xlu0 %626
    %v629 = vsel %vm172, %v623, %v627
    %v631 = vsel %vm199, %v629, 0
    %v634 = vsel %vm199, %v594, 0
    %636 = vmatprep.subr.mxu0 0.0
    %637 = vmatpush1.xpose.msra.mxu0 %v634
    %638 = vmatprep.subr.mxu0 0.0
    %639 = vmatpush1.xpose.msra.mxu0 0.0
    %640 = vmatprep.subr.mxu0 0.0
    %641 = vmatpush1.xpose.msra.mxu0 0.0
    %642 = vmatprep.subr.mxu0 0.0
    %643 = vmatpush1.xpose.msra.mxu0 0.0
    %644 = vmatprep.subr.mxu0 0.0
    %645 = vmatpush1.xpose.msra.mxu0 0.0
    %646 = vmatprep.subr.mxu0 0.0
    %647 = vmatpush1.xpose.msra.mxu0 0.0
    %648 = vmatprep.subr.mxu0 0.0
    %649 = vmatpush1.xpose.msra.mxu0 0.0
    %650 = vmatprep.subr.mxu0 0.0
    %651 = vmatpush1.xpose.msra.mxu0 0.0
    %652 = vmatprep.subr.mxu0 0.0
    %653 = vmatpush1.xpose.msra.mxu0 0.0
    %654 = vmatprep.subr.mxu0 0.0
    %655 = vmatpush1.xpose.msra.mxu0 0.0
    %656 = vmatprep.subr.mxu0 0.0
    %657 = vmatpush1.xpose.msra.mxu0 0.0
    %658 = vmatprep.subr.mxu0 0.0
    %659 = vmatpush1.xpose.msra.mxu0 0.0
    %660 = vmatprep.subr.mxu0 0.0
    %661 = vmatpush1.xpose.msra.mxu0 0.0
    %662 = vmatprep.subr.mxu0 0.0
    %663 = vmatpush1.xpose.msra.mxu0 0.0
    %664 = vmatprep.subr.mxu0 0.0
    %665 = vmatpush1.xpose.msra.mxu0 0.0
    %666 = vmatprep.subr.mxu0 0.0
    %667 = vmatpush1.xpose.msra.mxu0 0.0
    %668 = vmatprep.subr.mxu0 0.0
    %669 = vmatpush1.xpose.msra.mxu0 0.0
    %670 = vmatprep.subr.mxu0 0.0
    %671 = vmatpush1.xpose.msra.mxu0 0.0
    %672 = vmatprep.subr.mxu0 0.0
    %673 = vmatpush1.xpose.msra.mxu0 0.0
    %674 = vmatprep.subr.mxu0 0.0
    %675 = vmatpush1.xpose.msra.mxu0 0.0
    %676 = vmatprep.subr.mxu0 0.0
    %677 = vmatpush1.xpose.msra.mxu0 0.0
    %678 = vmatprep.subr.mxu0 0.0
    %679 = vmatpush1.xpose.msra.mxu0 0.0
    %680 = vmatprep.subr.mxu0 0.0
    %681 = vmatpush1.xpose.msra.mxu0 0.0
    %682 = vmatprep.subr.mxu0 0.0
    %683 = vmatpush1.xpose.msra.mxu0 0.0
    %684 = vmatprep.subr.mxu0 0.0
    %685 = vmatpush1.xpose.msra.mxu0 0.0
    %686 = vmatprep.subr.mxu0 0.0
    %687 = vmatpush1.xpose.msra.mxu0 0.0
    %688 = vmatprep.subr.mxu0 0.0
    %689 = vmatpush1.xpose.msra.mxu0 0.0
    %690 = vmatprep.subr.mxu0 0.0
    %691 = vmatpush1.xpose.msra.mxu0 0.0
    %692 = vmatprep.subr.mxu0 0.0
    %693 = vmatpush1.xpose.msra.mxu0 0.0
    %694 = vmatprep.subr.mxu0 0.0
    %695 = vmatpush1.xpose.msra.mxu0 0.0
    %696 = vmatprep.subr.mxu0 0.0
    %697 = vmatpush1.xpose.msra.mxu0 0.0
    %698 = vmatprep.subr.mxu0 0.0
    %699 = vmatpush1.xpose.msra.mxu0 0.0
    %700 = vmatprep.mubr.f32.mxu0 0.0
    %701 = vmatmul.mubr.f32.gmra.mrb[0].mxu0 %v631
    %v702 = vpop.f32.mrb[0].mxu0
    %v703 = vadd.f32 0.0, %v702
    %v704 = vpop.f32.mrb[0].mxu0
    %705 = vdwg.mxu0
    %v706 = vmul.f32 %v703, 0.35355338
    %v707 = vadd.f32 %v706, %v135
    %v708 = vsel %vm199, %v707, -inf
    %709 = vmax.xlane.f32.xlu0 %v708
    %v710 = vpop.xlane.xlu0 %709
    %v711 = vsub.f32 %v707, %v710
    %v712 = vmul.f32 %v711, 1.442695
    %v713 = vpow.pop %v712
    %v714 = vsel %vm199, %v713, 0.0
    %715 = vadd.xlane.f32.xlu0 %v714
    %v716 = vpop.xlane.xlu0 %715
    %v717 = vrcp.pop %v716
    %v718 = vmul.f32 %v713, %v717
    %719 = vrot.lane.b32.xlu0 %v125, 72
    %v720 = vpop.permute.xlu0 %719
    %v723 = vsel %vm199, %v718, 0
    %725 = vmatprep.subr.mxu0 0.0
    %726 = vmatpush1.msra.mxu0 %v720
    %727 = vmatprep.subr.mxu0 0.0
    %728 = vmatpush1.msra.mxu0 0.0
    %729 = vmatprep.subr.mxu0 0.0
    %730 = vmatpush1.msra.mxu0 0.0
    %731 = vmatprep.subr.mxu0 0.0
    %732 = vmatpush1.msra.mxu0 0.0
    %733 = vmatprep.subr.mxu0 0.0
    %734 = vmatpush1.msra.mxu0 0.0
    %735 = vmatprep.subr.mxu0 0.0
    %736 = vmatpush1.msra.mxu0 0.0
    %737 = vmatprep.subr.mxu0 0.0
    %738 = vmatpush1.msra.mxu0 0.0
    %739 = vmatprep.subr.mxu0 0.0
    %740 = vmatpush1.msra.mxu0 0.0
    %741 = vmatprep.subr.mxu0 0.0
    %742 = vmatpush1.msra.mxu0 0.0
    %743 = vmatprep.subr.mxu0 0.0
    %744 = vmatpush1.msra.mxu0 0.0
    %745 = vmatprep.subr.mxu0 0.0
    %746 = vmatpush1.msra.mxu0 0.0
    %747 = vmatprep.subr.mxu0 0.0
    %748 = vmatpush1.msra.mxu0 0.0
    %749 = vmatprep.subr.mxu0 0.0
    %750 = vmatpush1.msra.mxu0 0.0
    %751 = vmatprep.subr.mxu0 0.0
    %752 = vmatpush1.msra.mxu0 0.0
    %753 = vmatprep.subr.mxu0 0.0
    %754 = vmatpush1.msra.mxu0 0.0
    %755 = vmatprep.subr.mxu0 0.0
    %756 = vmatpush1.msra.mxu0 0.0
    %757 = vmatprep.subr.mxu0 0.0
    %758 = vmatpush1.msra.mxu0 0.0
    %759 = vmatprep.subr.mxu0 0.0
    %760 = vmatpush1.msra.mxu0 0.0
    %761 = vmatprep.subr.mxu0 0.0
    %762 = vmatpush1.msra.mxu0 0.0
    %763 = vmatprep.subr.mxu0 0.0
    %764 = vmatpush1.msra.mxu0 0.0
    %765 = vmatprep.subr.mxu0 0.0
    %766 = vmatpush1.msra.mxu0 0.0
    %767 = vmatprep.subr.mxu0 0.0
    %768 = vmatpush1.msra.mxu0 0.0
    %769 = vmatprep.subr.mxu0 0.0
    %770 = vmatpush1.msra.mxu0 0.0
    %771 = vmatprep.subr.mxu0 0.0
    %772 = vmatpush1.msra.mxu0 0.0
    %773 = vmatprep.subr.mxu0 0.0
    %774 = vmatpush1.msra.mxu0 0.0
    %775 = vmatprep.subr.mxu0 0.0
    %776 = vmatpush1.msra.mxu0 0.0
    %777 = vmatprep.subr.mxu0 0.0
    %778 = vmatpush1.msra.mxu0 0.0
    %779 = vmatprep.subr.mxu0 0.0
    %780 = vmatpush1.msra.mxu0 0.0
    %781 = vmatprep.subr.mxu0 0.0
    %782 = vmatpush1.msra.mxu0 0.0
    %783 = vmatprep.subr.mxu0 0.0
    %784 = vmatpush1.msra.mxu0 0.0
    %785 = vmatprep.subr.mxu0 0.0
    %786 = vmatpush1.msra.mxu0 0.0
    %787 = vmatprep.subr.mxu0 0.0
    %788 = vmatpush1.msra.mxu0 0.0
    %789 = vmatprep.mubr.f32.mxu0 0.0
    %790 = vmatmul.mubr.f32.gmra.mrb[0].mxu0 %v723
    %v791 = vpop.f32.mrb[0].mxu0
    %v792 = vadd.f32 0.0, %v791
    %v793 = vpop.f32.mrb[0].mxu0
    %794 = vdwg.mxu0
    %795 = vrot.lane.b32.xlu0 %v128, 24
    %v796 = vpop.permute.xlu0 %795
    %v798 = vmul.f32 %v125, %v796
    %799 = vrot.lane.b32.xlu0 %v129, 28
    %v800 = vpop.permute.xlu0 %799
    %v802 = vmul.f32 %v125, %v800
    %804 = vrot.lane.b32.xlu0 %v802, 124
    %v805 = vpop.permute.xlu0 %804
    %v807 = vsub.f32 %v798, %v805
    %808 = vrot.lane.b32.xlu0 %v129, 24
    %v809 = vpop.permute.xlu0 %808
    %v811 = vmul.f32 %v125, %v809
    %812 = vrot.lane.b32.xlu0 %v128, 28
    %v813 = vpop.permute.xlu0 %812
    %v815 = vmul.f32 %v125, %v813
    %817 = vrot.lane.b32.xlu0 %v815, 124
    %v818 = vpop.permute.xlu0 %817
    %v820 = vadd.f32 %v811, %v818
    %822 = vrot.lane.b32.xlu0 %v807, 104
    %v823 = vpop.permute.xlu0 %822
    %826 = vrot.lane.b32.xlu0 %v820, 108
    %v827 = vpop.permute.xlu0 %826
    %v829 = vsel %vm172, %v823, %v827
    %v831 = vsel %vm199, %v829, 0
    %833 = vmatprep.subr.mxu0 0.0
    %834 = vmatpush1.xpose.msra.mxu0 %v634
    %835 = vmatprep.subr.mxu0 0.0
    %836 = vmatpush1.xpose.msra.mxu0 0.0
    %837 = vmatprep.subr.mxu0 0.0
    %838 = vmatpush1.xpose.msra.mxu0 0.0
    %839 = vmatprep.subr.mxu0 0.0
    %840 = vmatpush1.xpose.msra.mxu0 0.0
    %841 = vmatprep.subr.mxu0 0.0
    %842 = vmatpush1.xpose.msra.mxu0 0.0
    %843 = vmatprep.subr.mxu0 0.0
    %844 = vmatpush1.xpose.msra.mxu0 0.0
    %845 = vmatprep.subr.mxu0 0.0
    %846 = vmatpush1.xpose.msra.mxu0 0.0
    %847 = vmatprep.subr.mxu0 0.0
    %848 = vmatpush1.xpose.msra.mxu0 0.0
    %849 = vmatprep.subr.mxu0 0.0
    %850 = vmatpush1.xpose.msra.mxu0 0.0
    %851 = vmatprep.subr.mxu0 0.0
    %852 = vmatpush1.xpose.msra.mxu0 0.0
    %853 = vmatprep.subr.mxu0 0.0
    %854 = vmatpush1.xpose.msra.mxu0 0.0
    %855 = vmatprep.subr.mxu0 0.0
    %856 = vmatpush1.xpose.msra.mxu0 0.0
    %857 = vmatprep.subr.mxu0 0.0
    %858 = vmatpush1.xpose.msra.mxu0 0.0
    %859 = vmatprep.subr.mxu0 0.0
    %860 = vmatpush1.xpose.msra.mxu0 0.0
    %861 = vmatprep.subr.mxu0 0.0
    %862 = vmatpush1.xpose.msra.mxu0 0.0
    %863 = vmatprep.subr.mxu0 0.0
    %864 = vmatpush1.xpose.msra.mxu0 0.0
    %865 = vmatprep.subr.mxu0 0.0
    %866 = vmatpush1.xpose.msra.mxu0 0.0
    %867 = vmatprep.subr.mxu0 0.0
    %868 = vmatpush1.xpose.msra.mxu0 0.0
    %869 = vmatprep.subr.mxu0 0.0
    %870 = vmatpush1.xpose.msra.mxu0 0.0
    %871 = vmatprep.subr.mxu0 0.0
    %872 = vmatpush1.xpose.msra.mxu0 0.0
    %873 = vmatprep.subr.mxu0 0.0
    %874 = vmatpush1.xpose.msra.mxu0 0.0
    %875 = vmatprep.subr.mxu0 0.0
    %876 = vmatpush1.xpose.msra.mxu0 0.0
    %877 = vmatprep.subr.mxu0 0.0
    %878 = vmatpush1.xpose.msra.mxu0 0.0
    %879 = vmatprep.subr.mxu0 0.0
    %880 = vmatpush1.xpose.msra.mxu0 0.0
    %881 = vmatprep.subr.mxu0 0.0
    %882 = vmatpush1.xpose.msra.mxu0 0.0
    %883 = vmatprep.subr.mxu0 0.0
    %884 = vmatpush1.xpose.msra.mxu0 0.0
    %885 = vmatprep.subr.mxu0 0.0
    %886 = vmatpush1.xpose.msra.mxu0 0.0
    %887 = vmatprep.subr.mxu0 0.0
    %888 = vmatpush1.xpose.msra.mxu0 0.0
    %889 = vmatprep.subr.mxu0 0.0
    %890 = vmatpush1.xpose.msra.mxu0 0.0
    %891 = vmatprep.subr.mxu0 0.0
    %892 = vmatpush1.xpose.msra.mxu0 0.0
    %893 = vmatprep.subr.mxu0 0.0
    %894 = vmatpush1.xpose.msra.mxu0 0.0
    %895 = vmatprep.subr.mxu0 0.0
    %896 = vmatpush1.xpose.msra.mxu0 0.0
    %897 = vmatprep.mubr.f32.mxu0 0.0
    %898 = vmatmul.mubr.f32.gmra.mrb[0].mxu0 %v831
    %v899 = vpop.f32.mrb[0].mxu0
    %v900 = vadd.f32 0.0, %v899
    %v901 = vpop.f32.mrb[0].mxu0
    %902 = vdwg.mxu0
    %v903 = vmul.f32 %v900, 0.35355338
    %v904 = vadd.f32 %v903, %v135
    %v905 = vsel %vm199, %v904, -inf
    %906 = vmax.xlane.f32.xlu0 %v905
    %v907 = vpop.xlane.xlu0 %906
    %v908 = vsub.f32 %v904, %v907
    %v909 = vmul.f32 %v908, 1.442695
    %v910 = vpow.pop %v909
    %v911 = vsel %vm199, %v910, 0.0
    %912 = vadd.xlane.f32.xlu0 %v911
    %v913 = vpop.xlane.xlu0 %912
    %v914 = vrcp.pop %v913
    %v915 = vmul.f32 %v910, %v914
    %v917 = vsel %vm199, %v915, 0
    %919 = vmatprep.subr.mxu0 0.0
    %920 = vmatpush1.msra.mxu0 %v720
    %921 = vmatprep.subr.mxu0 0.0
    %922 = vmatpush1.msra.mxu0 0.0
    %923 = vmatprep.subr.mxu0 0.0
    %924 = vmatpush1.msra.mxu0 0.0
    %925 = vmatprep.subr.mxu0 0.0
    %926 = vmatpush1.msra.mxu0 0.0
    %927 = vmatprep.subr.mxu0 0.0
    %928 = vmatpush1.msra.mxu0 0.0
    %929 = vmatprep.subr.mxu0 0.0
    %930 = vmatpush1.msra.mxu0 0.0
    %931 = vmatprep.subr.mxu0 0.0
    %932 = vmatpush1.msra.mxu0 0.0
    %933 = vmatprep.subr.mxu0 0.0
    %934 = vmatpush1.msra.mxu0 0.0
    %935 = vmatprep.subr.mxu0 0.0
    %936 = vmatpush1.msra.mxu0 0.0
    %937 = vmatprep.subr.mxu0 0.0
    %938 = vmatpush1.msra.mxu0 0.0
    %939 = vmatprep.subr.mxu0 0.0
    %940 = vmatpush1.msra.mxu0 0.0
    %941 = vmatprep.subr.mxu0 0.0
    %942 = vmatpush1.msra.mxu0 0.0
    %943 = vmatprep.subr.mxu0 0.0
    %944 = vmatpush1.msra.mxu0 0.0
    %945 = vmatprep.subr.mxu0 0.0
    %946 = vmatpush1.msra.mxu0 0.0
    %947 = vmatprep.subr.mxu0 0.0
    %948 = vmatpush1.msra.mxu0 0.0
    %949 = vmatprep.subr.mxu0 0.0
    %950 = vmatpush1.msra.mxu0 0.0
    %951 = vmatprep.subr.mxu0 0.0
    %952 = vmatpush1.msra.mxu0 0.0
    %953 = vmatprep.subr.mxu0 0.0
    %954 = vmatpush1.msra.mxu0 0.0
    %955 = vmatprep.subr.mxu0 0.0
    %956 = vmatpush1.msra.mxu0 0.0
    %957 = vmatprep.subr.mxu0 0.0
    %958 = vmatpush1.msra.mxu0 0.0
    %959 = vmatprep.subr.mxu0 0.0
    %960 = vmatpush1.msra.mxu0 0.0
    %961 = vmatprep.subr.mxu0 0.0
    %962 = vmatpush1.msra.mxu0 0.0
    %963 = vmatprep.subr.mxu0 0.0
    %964 = vmatpush1.msra.mxu0 0.0
    %965 = vmatprep.subr.mxu0 0.0
    %966 = vmatpush1.msra.mxu0 0.0
    %967 = vmatprep.subr.mxu0 0.0
    %968 = vmatpush1.msra.mxu0 0.0
    %969 = vmatprep.subr.mxu0 0.0
    %970 = vmatpush1.msra.mxu0 0.0
    %971 = vmatprep.subr.mxu0 0.0
    %972 = vmatpush1.msra.mxu0 0.0
    %973 = vmatprep.subr.mxu0 0.0
    %974 = vmatpush1.msra.mxu0 0.0
    %975 = vmatprep.subr.mxu0 0.0
    %976 = vmatpush1.msra.mxu0 0.0
    %977 = vmatprep.subr.mxu0 0.0
    %978 = vmatpush1.msra.mxu0 0.0
    %979 = vmatprep.subr.mxu0 0.0
    %980 = vmatpush1.msra.mxu0 0.0
    %981 = vmatprep.subr.mxu0 0.0
    %982 = vmatpush1.msra.mxu0 0.0
    %983 = vmatprep.mubr.f32.mxu0 0.0
    %984 = vmatmul.mubr.f32.gmra.mrb[0].mxu0 %v917
    %v985 = vpop.f32.mrb[0].mxu0
    %v986 = vadd.f32 0.0, %v985
    %v987 = vpop.f32.mrb[0].mxu0
    %988 = vdwg.mxu0
    %990 = vrot.lane.b32.xlu0 %v557, 8
    %v991 = vpop.permute.xlu0 %990
    %994 = vrot.lane.b32.xlu0 %v792, 16
    %v995 = vpop.permute.xlu0 %994
    %998 = vrot.lane.b32.xlu0 %v986, 24
    %v999 = vpop.permute.xlu0 %998
    %v1001 = vsel %vm199, %v363, %v991
    %vm1002 = vcmask 130048
    %v1003 = vsel %vm1002, %v1001, %v995
    %vm1004 = vcmask 195584
    %v1005 = vsel %vm1004, %v1003, %v999
    %v1006 = vld [vmem:[#allocation5] sm:$0xff]
    %v1007 = vld [vmem:[#allocation5 + $0x8] sm:$0xff]
    %v1008 = vld [vmem:[#allocation5 + $0x10] sm:$0xff]
    %v1009 = vld [vmem:[#allocation5 + $0x18] sm:$0xff]
    %v1011 = vsel %vm54, %v1005, 0
    %1013 = vmatprep.subr.mxu0 0.0
    %1014 = vmatpush1.msra.mxu0 %v1006
    %1015 = vmatprep.subr.mxu0 0.0
    %1016 = vmatpush1.msra.mxu0 %v1007
    %1017 = vmatprep.subr.mxu0 0.0
    %1018 = vmatpush1.msra.mxu0 %v1008
    %1019 = vmatprep.subr.mxu0 0.0
    %1020 = vmatpush1.msra.mxu0 %v1009
    %1021 = vmatprep.subr.mxu0 0.0
    %1022 = vmatpush1.msra.mxu0 0.0
    %1023 = vmatprep.subr.mxu0 0.0
    %1024 = vmatpush1.msra.mxu0 0.0
    %1025 = vmatprep.subr.mxu0 0.0
    %1026 = vmatpush1.msra.mxu0 0.0
    %1027 = vmatprep.subr.mxu0 0.0
    %1028 = vmatpush1.msra.mxu0 0.0
    %1029 = vmatprep.subr.mxu0 0.0
    %1030 = vmatpush1.msra.mxu0 0.0
    %1031 = vmatprep.subr.mxu0 0.0
    %1032 = vmatpush1.msra.mxu0 0.0
    %1033 = vmatprep.subr.mxu0 0.0
    %1034 = vmatpush1.msra.mxu0 0.0
    %1035 = vmatprep.subr.mxu0 0.0
    %1036 = vmatpush1.msra.mxu0 0.0
    %1037 = vmatprep.subr.mxu0 0.0
    %1038 = vmatpush1.msra.mxu0 0.0
    %1039 = vmatprep.subr.mxu0 0.0
    %1040 = vmatpush1.msra.mxu0 0.0
    %1041 = vmatprep.subr.mxu0 0.0
    %1042 = vmatpush1.msra.mxu0 0.0
    %1043 = vmatprep.subr.mxu0 0.0
    %1044 = vmatpush1.msra.mxu0 0.0
    %1045 = vmatprep.subr.mxu0 0.0
    %1046 = vmatpush1.msra.mxu0 0.0
    %1047 = vmatprep.subr.mxu0 0.0
    %1048 = vmatpush1.msra.mxu0 0.0
    %1049 = vmatprep.subr.mxu0 0.0
    %1050 = vmatpush1.msra.mxu0 0.0
    %1051 = vmatprep.subr.mxu0 0.0
    %1052 = vmatpush1.msra.mxu0 0.0
    %1053 = vmatprep.subr.mxu0 0.0
    %1054 = vmatpush1.msra.mxu0 0.0
    %1055 = vmatprep.subr.mxu0 0.0
    %1056 = vmatpush1.msra.mxu0 0.0
    %1057 = vmatprep.subr.mxu0 0.0
    %1058 = vmatpush1.msra.mxu0 0.0
    %1059 = vmatprep.subr.mxu0 0.0
    %1060 = vmatpush1.msra.mxu0 0.0
    %1061 = vmatprep.subr.mxu0 0.0
    %1062 = vmatpush1.msra.mxu0 0.0
    %1063 = vmatprep.subr.mxu0 0.0
    %1064 = vmatpush1.msra.mxu0 0.0
    %1065 = vmatprep.subr.mxu0 0.0
    %1066 = vmatpush1.msra.mxu0 0.0
    %1067 = vmatprep.subr.mxu0 0.0
    %1068 = vmatpush1.msra.mxu0 0.0
    %1069 = vmatprep.subr.mxu0 0.0
    %1070 = vmatpush1.msra.mxu0 0.0
    %1071 = vmatprep.subr.mxu0 0.0
    %1072 = vmatpush1.msra.mxu0 0.0
    %1073 = vmatprep.subr.mxu0 0.0
    %1074 = vmatpush1.msra.mxu0 0.0
    %1075 = vmatprep.subr.mxu0 0.0
    %1076 = vmatpush1.msra.mxu0 0.0
    %1077 = vmatprep.mubr.f32.mxu0 0.0
    %1078 = vmatmul.mubr.f32.gmra.mrb[0].mxu0 %v1011
    %v1079 = vpop.f32.mrb[0].mxu0
    %v1080 = vadd.f32 0.0, %v1079
    %v1081 = vpop.f32.mrb[0].mxu0
    %1082 = vdwg.mxu0
    %1083 = vst.msk [vmem:[#allocation7] sm:$0xff] %vm54, %v1080
    // Predicated region
    $region30: #{tpu_custom_call.1} parent=1 // pred_check
      _
    $region31: #{tpu_custom_call.1} parent=1 // pred_check_branch
      %1085 = sbr.rel (0) target = $region33
    $region32: #{tpu_custom_call.1} parent=1 // pred_region
      %s1087 = ssub.s32 128, 128
      %1088 = vsyncadd [#allocation4], %s1087
      %s1090 = sshll.u32 [#allocation7], 4
      %s1091 = int_to_ptr.vmem [resolvable:$true] %s1090
      %1093 = dma.vmem_to_hbm [thread:$0]  %s1091, 128, %s5, [#allocation4]
    $region33: #{tpu_custom_call.1} parent=1 // pred_fallthru
      _
    // Predicated region
    $region34: #{tpu_custom_call.1} parent=1 // pred_check
      _
    $region35: #{tpu_custom_call.1} parent=1 // pred_check_branch
      %1095 = sbr.rel (0) target = $region37
    $region36: #{tpu_custom_call.1} parent=1 // pred_region
      %1096 = dma.done [#allocation4], 128
    $region37: #{tpu_custom_call.1} parent=1 // pred_fallthru
      _
    %1097 = vsyncpa [#allocation3], 1
    %1098 = vsyncpa [#allocation6], 1
    %1099 = vsyncpa [#allocation4], 1

</llo_original>
